<compile_context>
chip_gen: v7x
topology: tpu7x:2x2x1
jax: 0.10.0
libtpu: 0.0.40
codegen_flags: <defaults>
</compile_context>

<pallas_src>
import functools

import jax
import jax.numpy as jnp
from jax.experimental import pallas as pl
from jax.experimental.pallas import tpu as pltpu


def _round_up(x, m):
    return ((x + m - 1) // m) * m


# Tile caps: MXU/lane aligned, VMEM-safe on v5e/v6e/v7x.
_TM_MAX = 256
_TK_MAX = 512
_TN_MAX = 512


def _tile_m(m):
    return min(_TM_MAX, _round_up(max(m, 1), 16))


def _tile_k(k):
    return min(_TK_MAX, _round_up(max(k, 1), 128))


def _tile_n(n):
    return min(_TN_MAX, _round_up(max(n, 1), 128))


def _fc_kernel(x_ref, w_ref, b_ref, o_ref, acc_ref, *, apply_relu):
    k = pl.program_id(2)

    @pl.when(k == 0)
    def _init():
        acc_ref[...] = jnp.zeros_like(acc_ref)

    # MXU matmul, f32 accumulation in VMEM scratch.
    acc_ref[...] += jnp.dot(x_ref[...], w_ref[...],
                            preferred_element_type=jnp.float32)

    @pl.when(k == pl.num_programs(2) - 1)
    def _finalize():
        out = acc_ref[...] + b_ref[...].astype(jnp.float32)  # (1,tn) broadcasts
        if apply_relu:
            out = jnp.maximum(out, 0.0)
        o_ref[...] = out.astype(o_ref.dtype)


def prepare_fc_params(weight, bias, *, compute_dtype=None):
    """One-time packing of PyTorch-layout nn.Linear params.

    weight: (out_features, in_features) -- PyTorch convention.
    bias:   (out_features,)
    Returns (w_packed, b_packed, out_features) where
      w_packed: (K_pad, N_pad) transposed + zero-padded (optionally bf16),
      b_packed: (1, N_pad) float32.
    Done once outside the per-call hot path (no per-forward weight.T traffic).
    """
    out_f, in_f = weight.shape
    tk = _tile_k(in_f)
    tn = _tile_n(out_f)
    k_pad = _round_up(in_f, tk)
    n_pad = _round_up(out_f, tn)

    w_t = jnp.asarray(weight).T  # (in_f, out_f)
    if compute_dtype is not None:
        w_t = w_t.astype(compute_dtype)
    w_packed = jnp.pad(w_t, ((0, k_pad - in_f), (0, n_pad - out_f)))

    b_packed = jnp.pad(jnp.asarray(bias).astype(jnp.float32),
                       (0, n_pad - out_f)).reshape(1, n_pad)
    return w_packed, b_packed, out_f


@functools.partial(jax.jit, static_argnums=(3,),
                   static_argnames=("apply_relu", "compute_dtype"))
def fc_forward(x, w_packed, b_packed, out_features, *, apply_relu=True,
               compute_dtype=None):
    """x: (..., in_features) -> (..., out_features), matching nn.Linear+ReLU."""
    orig_dtype = x.dtype
    lead = x.shape[:-1]
    in_f = x.shape[-1]
    x2 = x.reshape(-1, in_f)
    M = x2.shape[0]
    K_pad, N_pad = w_packed.shape

    tm = _tile_m(M)
    tk = _tile_k(in_f)          # must match prepare_fc_params
    tn = _tile_n(out_features)
    assert K_pad == _round_up(in_f, tk) and K_pad % tk == 0
    assert N_pad == _round_up(out_features, tn) and N_pad % tn == 0

    m_pad = _round_up(M, tm)
    if compute_dtype is not None:
        x2 = x2.astype(compute_dtype)
    x_p = jnp.pad(x2, ((0, m_pad - M), (0, K_pad - in_f)))

    grid = (m_pad // tm, N_pad // tn, K_pad // tk)

    flops = 2 * m_pad * K_pad * N_pad
    bytes_accessed = (x_p.size * x_p.dtype.itemsize
                      + w_packed.size * w_packed.dtype.itemsize
                      + b_packed.size * b_packed.dtype.itemsize
                      + m_pad * N_pad * jnp.dtype(orig_dtype).itemsize)

    out = pl.pallas_call(
        functools.partial(_fc_kernel, apply_relu=apply_relu),
        out_shape=jax.ShapeDtypeStruct((m_pad, N_pad), orig_dtype),
        grid_spec=pltpu.PrefetchScalarGridSpec(
            num_scalar_prefetch=0,
            grid=grid,
            in_specs=[
                pl.BlockSpec((tm, tk), lambda i, j, k: (i, k)),
                # For very thin-batch, weight-DMA-bound shapes one could add
                # pipeline_mode=pl.Buffered(3) here (check VMEM headroom on v7x).
                pl.BlockSpec((tk, tn), lambda i, j, k: (k, j)),
                pl.BlockSpec((1, tn), lambda i, j, k: (0, j)),
            ],
            out_specs=pl.BlockSpec((tm, tn), lambda i, j, k: (i, j)),
            scratch_shapes=[pltpu.VMEM((tm, tn), jnp.float32)],
        ),
        compiler_params=pltpu.CompilerParams(
            dimension_semantics=("parallel", "parallel", "arbitrary")),
        cost_estimate=pl.CostEstimate(flops=flops, transcendentals=0,
                                      bytes_accessed=bytes_accessed),
    )(x_p, w_packed, b_packed)

    out = out[:M, :out_features]
    return out.reshape(*lead, out_features)


# TODO(synk): NL='prelu' needs a learnable per-channel slope; only the
# relu / identity (NL=None) paths of the original FC module are implemented.


if __name__ == "__main__":
    key = jax.random.PRNGKey(0)
    kx, kw, kb, kx2, kw2, kb2 = jax.random.split(key, 6)

    # ---- Case 1: small shapes matching FC(in_features=32, out_features=64) ----
    B, in_f, out_f = 8, 32, 64
    x = jax.random.normal(kx, (B, in_f), dtype=jnp.float32)
    bound = 1.0 / jnp.sqrt(in_f)
    weight = jax.random.uniform(kw, (out_f, in_f), minval=-bound, maxval=bound,
                                dtype=jnp.float32)
    bias = jax.random.uniform(kb, (out_f,), minval=-bound, maxval=bound,
                              dtype=jnp.float32)

    w_p, b_p, n_out = prepare_fc_params(weight, bias)
    out = fc_forward(x, w_p, b_p, n_out, apply_relu=True)
    out = jax.block_until_ready(out)

    ref = jnp.maximum(x @ weight.T + bias, 0.0)
    assert out.shape == (B, out_f)
    assert jnp.allclose(out, ref, atol=1e-4, rtol=1e-4)

    # ---- Case 2: larger shapes exercising the K-accumulation grid + bf16 MXU ----
    B2, in_f2, out_f2 = 256, 1024, 512
    x2 = jax.random.normal(kx2, (B2, in_f2), dtype=jnp.float32)
    bound2 = 1.0 / jnp.sqrt(in_f2)
    weight2 = jax.random.uniform(kw2, (out_f2, in_f2), minval=-bound2,
                                 maxval=bound2, dtype=jnp.float32)
    bias2 = jax.random.uniform(kb2, (out_f2,), minval=-bound2, maxval=bound2,
                               dtype=jnp.float32)

    w_p2, b_p2, n_out2 = prepare_fc_params(weight2, bias2,
                                           compute_dtype=jnp.bfloat16)
    out2 = fc_forward(x2, w_p2, b_p2, n_out2, apply_relu=True,
                      compute_dtype=jnp.bfloat16)
    out2 = jax.block_until_ready(out2)

    x2_bf = x2.astype(jnp.bfloat16).astype(jnp.float32)
    w2_bf = weight2.astype(jnp.bfloat16).astype(jnp.float32)
    ref2 = jnp.maximum(x2_bf @ w2_bf.T + bias2, 0.0)
    assert out2.shape == (B2, out_f2)
    rel_err = jnp.max(jnp.abs(out2 - ref2)) / (jnp.max(jnp.abs(ref2)) + 1e-6)
    assert rel_err < 5e-3, f"rel_err={rel_err}"

    print("KERNEL_OK")
</pallas_src>

<mosaic_0001>
module attributes {stable_mosaic.version = 11 : i64} {
  func.func @_fc_kernel(%arg0: i32, %arg1: i32, %arg2: i32, %arg3: memref<16x128xf32, #tpu.memory_space<vmem>>, %arg4: memref<128x128xf32, #tpu.memory_space<vmem>>, %arg5: memref<1x128xf32, #tpu.memory_space<vmem>>, %arg6: memref<16x128xf32, #tpu.memory_space<vmem>>, %arg7: memref<16x128xf32, #tpu.memory_space<vmem>>) attributes {dimension_semantics = [#tpu.dimension_semantics<parallel>, #tpu.dimension_semantics<parallel>, #tpu.dimension_semantics<arbitrary>], iteration_bounds = array<i64: 1, 1, 1>, scalar_prefetch = 0 : i64, scratch_operands = 1 : i64, tpu.core_type = #tpu.core_type<tc>, window_params = [{transform_indices = @transform_0, window_bounds = array<i64: 16, 128>}, {transform_indices = @transform_1, window_bounds = array<i64: 128, 128>}, {transform_indices = @transform_2, window_bounds = array<i64: 1, 128>}, {transform_indices = @transform_3, window_bounds = array<i64: 16, 128>}]} {
    %c0_i32 = arith.constant 0 : i32
    %0 = arith.cmpi eq, %arg2, %c0_i32 : i32
    %1 = arith.extui %0 : i1 to i32
    %c0_i32_0 = arith.constant 0 : i32
    %2 = arith.cmpi ne, %1, %c0_i32_0 : i32
    scf.if %2 {
      %cst_10 = arith.constant 0.000000e+00 : f32
      %12 = vector.broadcast %cst_10 : f32 to vector<16x128xf32>
      %c0_11 = arith.constant 0 : index
      %c0_12 = arith.constant 0 : index
      %13 = vector.load %arg7[%c0_11, %c0_12] : memref<16x128xf32, #tpu.memory_space<vmem>>, vector<16x128xf32>
      tpu.vector_store %arg7[%c0_11, %c0_12], %12 {strides = array<i32>} : memref<16x128xf32, #tpu.memory_space<vmem>>, vector<16x128xf32>,
    } else {
    }
    %c0 = arith.constant 0 : index
    %c0_1 = arith.constant 0 : index
    %3 = vector.load %arg7[%c0, %c0_1] : memref<16x128xf32, #tpu.memory_space<vmem>>, vector<16x128xf32>
    %c0_2 = arith.constant 0 : index
    %c0_3 = arith.constant 0 : index
    %4 = vector.load %arg3[%c0_2, %c0_3] : memref<16x128xf32, #tpu.memory_space<vmem>>, vector<16x128xf32>
    %c0_4 = arith.constant 0 : index
    %c0_5 = arith.constant 0 : index
    %5 = vector.load %arg4[%c0_4, %c0_5] : memref<128x128xf32, #tpu.memory_space<vmem>>, vector<128x128xf32>
    %cst = arith.constant dense<0.000000e+00> : vector<16x128xf32>
    %6 = tpu.matmul %4, %5, %cst {dimension_numbers = #tpu.dot_dimension_numbers<[1], [0], [0], [1], [0, 0, 1, 1], [], []>} : vector<16x128xf32>, vector<128x128xf32>, vector<16x128xf32> -> vector<16x128xf32>
    %7 = arith.addf %3, %6 : vector<16x128xf32>
    %c0_6 = arith.constant 0 : index
    %c0_7 = arith.constant 0 : index
    %8 = vector.load %arg7[%c0_6, %c0_7] : memref<16x128xf32, #tpu.memory_space<vmem>>, vector<16x128xf32>
    tpu.vector_store %arg7[%c0_6, %c0_7], %7 {strides = array<i32>} : memref<16x128xf32, #tpu.memory_space<vmem>>, vector<16x128xf32>,
    %c0_i32_8 = arith.constant 0 : i32
    %9 = arith.cmpi eq, %arg2, %c0_i32_8 : i32
    %10 = arith.extui %9 : i1 to i32
    %c0_i32_9 = arith.constant 0 : i32
    %11 = arith.cmpi ne, %10, %c0_i32_9 : i32
    scf.if %11 {
      %c0_10 = arith.constant 0 : index
      %c0_11 = arith.constant 0 : index
      %12 = vector.load %arg7[%c0_10, %c0_11] : memref<16x128xf32, #tpu.memory_space<vmem>>, vector<16x128xf32>
      %c0_12 = arith.constant 0 : index
      %c0_13 = arith.constant 0 : index
      %13 = vector.load %arg5[%c0_12, %c0_13] : memref<1x128xf32, #tpu.memory_space<vmem>>, vector<1x128xf32>
      %14 = vector.broadcast %13 : vector<1x128xf32> to vector<16x128xf32>
      %15 = arith.addf %12, %14 : vector<16x128xf32>
      %cst_14 = arith.constant 0.000000e+00 : f32
      %16 = vector.broadcast %cst_14 : f32 to vector<16x128xf32>
      %17 = arith.maximumf %15, %16 : vector<16x128xf32>
      %c0_15 = arith.constant 0 : index
      %c0_16 = arith.constant 0 : index
      %18 = vector.load %arg6[%c0_15, %c0_16] : memref<16x128xf32, #tpu.memory_space<vmem>>, vector<16x128xf32>
      tpu.vector_store %arg6[%c0_15, %c0_16], %17 {strides = array<i32>} : memref<16x128xf32, #tpu.memory_space<vmem>>, vector<16x128xf32>,
    } else {
    }
    return
  }
  func.func @transform_0(%arg0: i32, %arg1: i32, %arg2: i32) -> (i32, i32) {
    %c0_i32 = arith.constant 0 : i32
    return %arg0, %arg2 : i32, i32
  }
  func.func @transform_1(%arg0: i32, %arg1: i32, %arg2: i32) -> (i32, i32) {
    %c0_i32 = arith.constant 0 : i32
    return %arg2, %arg1 : i32, i32
  }
  func.func @transform_2(%arg0: i32, %arg1: i32, %arg2: i32) -> (i32, i32) {
    %c0_i32 = arith.constant 0 : i32
    %c0_i32_0 = arith.constant 0 : i32
    return %c0_i32, %arg1 : i32, i32
  }
  func.func @transform_3(%arg0: i32, %arg1: i32, %arg2: i32) -> (i32, i32) {
    %c0_i32 = arith.constant 0 : i32
    return %arg0, %arg1 : i32, i32
  }
}

</mosaic_0001>

<llo_original>
// kernel: fc_forward.1
$region0: #{fc_forward.1}
  #allocation0 [shape = 'u32[]', space=smem, size = 0x4, offset = 0x4, fixed_abs, tag = 'smem constant byte address 0x4 - core index']
  #allocation1 [shape = 'u32[144,128]{1,0:T(1,128)}', space=vmem, size = 0x12000, scoped, tag = 'internal scratch']
  #allocation2 [shape = 'f32[16,128]{1,0:T(8,128)}', space=vmem, size = 0x2000, scoped, tag = 'scratch operand']
  %s0 = inlined_call_operand.vmem [shape: f32[16,128], index: 0, kind: input, shape index: {}]
  %s1 = inlined_call_operand.hbm [shape: f32[128,128], index: 1, kind: input, shape index: {}]
  %s2 = inlined_call_operand.vmem [shape: f32[1,128], index: 2, kind: input, shape index: {}]
  %s3 = inlined_call_operand.vmem [shape: f32[16,128], index: 3, kind: output, shape index: {}]
  %s4 = sld [smem:[#allocation0]]
  $region34: #{fc_forward.1} parent=0
    _
  %s6 = ssub.s32 1, %s4
  %s7 = scalar_select 0, %s6, %s4
  $region1: #{fc_forward.1} parent=0
    #allocation3 [shape = 'u8[65536]{0}', space=vmem, size = 0x10000, scoped, tag = 'input window, operand 1, single buffered']
    #allocation4 [shape = 's32[1]{0}', space=sflag, size = 0x4, scoped, tag = 'scoped memory for fc_forward.1']
    %8 = vsyncpa [#allocation4], 0
    // Predicated region
    $region2: #{fc_forward.1} parent=1 // pred_check
      _
    $region3: #{fc_forward.1} parent=1 // pred_check_branch
      %10 = sbr.rel (0) target = $region5
    $region4: #{fc_forward.1} parent=1 // pred_region
      _
    $region5: #{fc_forward.1} parent=1 // pred_fallthru
      _
    // Predicated region
    $region6: #{fc_forward.1} parent=1 // pred_check
      _
    $region7: #{fc_forward.1} parent=1 // pred_check_branch
      %12 = sbr.rel (0) target = $region9
    $region8: #{fc_forward.1} parent=1 // pred_region
      %s14 = ssub.s32 2048, 2048
      %15 = vsyncadd [#allocation4], %s14
      %s16 = sshll.u32 [#allocation3], 4
      %s17 = int_to_ptr.vmem [resolvable:$true] %s16
      %22 = dma.hbm_to_vmem [thread:$0]  %s1, 2048, %s17, [#allocation4], 128, 128, 8
    $region9: #{fc_forward.1} parent=1 // pred_fallthru
      _
    // Predicated region
    $region10: #{fc_forward.1} parent=1 // pred_check
      _
    $region11: #{fc_forward.1} parent=1 // pred_check_branch
      %24 = sbr.rel (0) target = $region13
    $region12: #{fc_forward.1} parent=1 // pred_region
      _
    $region13: #{fc_forward.1} parent=1 // pred_fallthru
      _
    // Predicated region
    $region14: #{fc_forward.1} parent=1 // pred_check
      _
    $region15: #{fc_forward.1} parent=1 // pred_check_branch
      %26 = sbr.rel (0) target = $region17
    $region16: #{fc_forward.1} parent=1 // pred_region
      %27 = dma.done [#allocation4], 2048
    $region17: #{fc_forward.1} parent=1 // pred_fallthru
      _
    %p28 = scmp.eq.s32.totalorder 0, 0
    // Predicated region
    $region18: #{fc_forward.1} parent=1 // pred_check
      %p29 = pneg %p28
    $region19: #{fc_forward.1} parent=1 // pred_check_branch
      %31 = sbr.rel (%p29) target = $region21
    $region20: #{fc_forward.1} parent=1 // pred_region
      %32 = vst [vmem:[#allocation2] sm:$0xff] 0.0
      %33 = vst [vmem:[#allocation2 + $0x8] sm:$0xff] 0.0
    $region21: #{fc_forward.1} parent=1 // pred_fallthru
      _
    %v34 = vld [vmem:[#allocation2] sm:$0xff]
    %v35 = vld [vmem:[#allocation2 + $0x8] sm:$0xff]
    %v36 = vld [vmem:[%s0] sm:$0xff]
    %v37 = vld [vmem:[%s0 + $0x8] sm:$0xff]
    %v38 = vld [vmem:[#allocation3] sm:$0xff]
    %v39 = vld [vmem:[#allocation3 + $0x8] sm:$0xff]
    %v40 = vld [vmem:[#allocation3 + $0x10] sm:$0xff]
    %v41 = vld [vmem:[#allocation3 + $0x18] sm:$0xff]
    %v42 = vld [vmem:[#allocation3 + $0x20] sm:$0xff]
    %v43 = vld [vmem:[#allocation3 + $0x28] sm:$0xff]
    %v44 = vld [vmem:[#allocation3 + $0x30] sm:$0xff]
    %v45 = vld [vmem:[#allocation3 + $0x38] sm:$0xff]
    %v46 = vld [vmem:[#allocation3 + $0x40] sm:$0xff]
    %v47 = vld [vmem:[#allocation3 + $0x48] sm:$0xff]
    %v48 = vld [vmem:[#allocation3 + $0x50] sm:$0xff]
    %v49 = vld [vmem:[#allocation3 + $0x58] sm:$0xff]
    %v50 = vld [vmem:[#allocation3 + $0x60] sm:$0xff]
    %v51 = vld [vmem:[#allocation3 + $0x68] sm:$0xff]
    %v52 = vld [vmem:[#allocation3 + $0x70] sm:$0xff]
    %v53 = vld [vmem:[#allocation3 + $0x78] sm:$0xff]
    %54 = vmatprep.subr.mxu0 0.0
    %55 = vmatpush1.msra.mxu0 %v38
    %56 = vmatprep.subr.mxu0 0.0
    %57 = vmatpush1.msra.mxu0 %v39
    %58 = vmatprep.subr.mxu0 0.0
    %59 = vmatpush1.msra.mxu0 %v40
    %60 = vmatprep.subr.mxu0 0.0
    %61 = vmatpush1.msra.mxu0 %v41
    %62 = vmatprep.subr.mxu0 0.0
    %63 = vmatpush1.msra.mxu0 %v42
    %64 = vmatprep.subr.mxu0 0.0
    %65 = vmatpush1.msra.mxu0 %v43
    %66 = vmatprep.subr.mxu0 0.0
    %67 = vmatpush1.msra.mxu0 %v44
    %68 = vmatprep.subr.mxu0 0.0
    %69 = vmatpush1.msra.mxu0 %v45
    %70 = vmatprep.subr.mxu0 0.0
    %71 = vmatpush1.msra.mxu0 %v46
    %72 = vmatprep.subr.mxu0 0.0
    %73 = vmatpush1.msra.mxu0 %v47
    %74 = vmatprep.subr.mxu0 0.0
    %75 = vmatpush1.msra.mxu0 %v48
    %76 = vmatprep.subr.mxu0 0.0
    %77 = vmatpush1.msra.mxu0 %v49
    %78 = vmatprep.subr.mxu0 0.0
    %79 = vmatpush1.msra.mxu0 %v50
    %80 = vmatprep.subr.mxu0 0.0
    %81 = vmatpush1.msra.mxu0 %v51
    %82 = vmatprep.subr.mxu0 0.0
    %83 = vmatpush1.msra.mxu0 %v52
    %84 = vmatprep.subr.mxu0 0.0
    %85 = vmatpush1.msra.mxu0 %v53
    %86 = vmatprep.subr.mxu0 0.0
    %87 = vmatpush1.msra.mxu0 0.0
    %88 = vmatprep.subr.mxu0 0.0
    %89 = vmatpush1.msra.mxu0 0.0
    %90 = vmatprep.subr.mxu0 0.0
    %91 = vmatpush1.msra.mxu0 0.0
    %92 = vmatprep.subr.mxu0 0.0
    %93 = vmatpush1.msra.mxu0 0.0
    %94 = vmatprep.subr.mxu0 0.0
    %95 = vmatpush1.msra.mxu0 0.0
    %96 = vmatprep.subr.mxu0 0.0
    %97 = vmatpush1.msra.mxu0 0.0
    %98 = vmatprep.subr.mxu0 0.0
    %99 = vmatpush1.msra.mxu0 0.0
    %100 = vmatprep.subr.mxu0 0.0
    %101 = vmatpush1.msra.mxu0 0.0
    %102 = vmatprep.subr.mxu0 0.0
    %103 = vmatpush1.msra.mxu0 0.0
    %104 = vmatprep.subr.mxu0 0.0
    %105 = vmatpush1.msra.mxu0 0.0
    %106 = vmatprep.subr.mxu0 0.0
    %107 = vmatpush1.msra.mxu0 0.0
    %108 = vmatprep.subr.mxu0 0.0
    %109 = vmatpush1.msra.mxu0 0.0
    %110 = vmatprep.subr.mxu0 0.0
    %111 = vmatpush1.msra.mxu0 0.0
    %112 = vmatprep.subr.mxu0 0.0
    %113 = vmatpush1.msra.mxu0 0.0
    %114 = vmatprep.subr.mxu0 0.0
    %115 = vmatpush1.msra.mxu0 0.0
    %116 = vmatprep.subr.mxu0 0.0
    %117 = vmatpush1.msra.mxu0 0.0
    %118 = vmatprep.mubr.f32.mxu0 0.0
    %119 = vmatmul.mubr.f32.gmra.mrb[0].mxu0 %v36
    %v120 = vpop.f32.mrb[0].mxu0
    %v121 = vadd.f32 0.0, %v120
    %v122 = vpop.f32.mrb[0].mxu0
    %123 = vmatprep.mubr.f32.mxu0 0.0
    %124 = vmatmul.mubr.f32.gmra.mrb[0].mxu0 %v37
    %v125 = vpop.f32.mrb[0].mxu0
    %v126 = vadd.f32 0.0, %v125
    %v127 = vpop.f32.mrb[0].mxu0
    %128 = vdwg.mxu0
    %v129 = vadd.f32 %v34, %v121
    %v130 = vadd.f32 %v35, %v126
    %131 = vst [vmem:[#allocation2] sm:$0xff] %v129
    %132 = vst [vmem:[#allocation2 + $0x8] sm:$0xff] %v130
    // Predicated region
    $region22: #{fc_forward.1} parent=1 // pred_check
      %p133 = pneg %p28
    $region23: #{fc_forward.1} parent=1 // pred_check_branch
      %135 = sbr.rel (%p133) target = $region25
    $region24: #{fc_forward.1} parent=1 // pred_region
      %v136 = vld [vmem:[#allocation2] sm:$0xff]
      %v137 = vld [vmem:[#allocation2 + $0x8] sm:$0xff]
      %v138 = vld [vmem:[%s2] sm:$0x1]
      %v140 = vlaneseq
      %v141 = vshrl.u32 %v140, 7
      %v142 = vsub.s32 0, %v141
      %v143 = vrot.slane %v138, %v142
      %v145 = vadd.f32 %v136, %v143
      %v146 = vadd.f32 %v137, %v143
      %v147 = vmax.f32 %v145, 0.0
      %v148 = vmax.f32 %v146, 0.0
      %149 = vst [vmem:[%s3] sm:$0xff] %v147
      %150 = vst [vmem:[%s3 + $0x8] sm:$0xff] %v148
    $region25: #{fc_forward.1} parent=1 // pred_fallthru
      _
    // Predicated region
    $region26: #{fc_forward.1} parent=1 // pred_check
      _
    $region27: #{fc_forward.1} parent=1 // pred_check_branch
      %152 = sbr.rel (0) target = $region29
    $region28: #{fc_forward.1} parent=1 // pred_region
      _
    $region29: #{fc_forward.1} parent=1 // pred_fallthru
      _
    // Predicated region
    $region30: #{fc_forward.1} parent=1 // pred_check
      _
    $region31: #{fc_forward.1} parent=1 // pred_check_branch
      %154 = sbr.rel (0) target = $region33
    $region32: #{fc_forward.1} parent=1 // pred_region
      _
    $region33: #{fc_forward.1} parent=1 // pred_fallthru
      _
    %155 = vsyncpa [#allocation4], 1

</llo_original>
